<compile_context>
chip_gen: v7x
topology: tpu7x:2x2x1
jax: 0.10.0
libtpu: 0.0.40
codegen_flags: <defaults>
</compile_context>

<pallas_src>
import functools

import jax
import jax.numpy as jnp
from jax.experimental import pallas as pl
from jax.experimental.pallas import tpu as pltpu

HIDDEN = 256  # fixed by the PyTorch module (fc1/fc2 -> 256)


def _round_up(x, m):
    return ((x + m - 1) // m) * m


def policy_net_kernel(x_ref, w1_ref, b1_ref, w2_ref, b2_ref, wh_ref, bh_ref,
                      out_ref, *, action_dim):
    # bf16 operands into the MXU, f32 accumulation; elementwise math in f32.
    x = x_ref[...].astype(jnp.bfloat16)
    b1 = b1_ref[0]            # (HIDDEN,)
    b2 = b2_ref[0]            # (HIDDEN,)
    bh = bh_ref[0]            # (HP,)

    # x = relu(fc1(state))
    h1 = jnp.dot(x, w1_ref[...], preferred_element_type=jnp.float32) + b1
    h1 = jnp.maximum(h1, 0.0)

    # x = relu(fc2(x))
    h2 = jnp.dot(h1.astype(jnp.bfloat16), w2_ref[...],
                 preferred_element_type=jnp.float32) + b2
    h2 = jnp.maximum(h2, 0.0)

    # Fused heads: columns [0:A] = mean, [A:2A] = log_std, rest zero padding.
    head = jnp.dot(h2.astype(jnp.bfloat16), wh_ref[...],
                   preferred_element_type=jnp.float32) + bh

    # std = exp(clamp(log_std, -20, 2)) applied only to the log_std columns,
    # selected with a lane mask so the whole slab stays one lane-dense store.
    std_all = jnp.exp(jnp.clip(head, -20.0, 2.0))
    cols = jax.lax.broadcasted_iota(jnp.int32, head.shape, 1)
    is_std_col = (cols >= action_dim) & (cols < 2 * action_dim)
    out_ref[...] = jnp.where(is_std_col, std_all, head).astype(out_ref.dtype)


def policy_network_forward(state, params):
    """Pallas forward pass. Returns (mean, std), each [batch, action_dim]."""
    w1, b1, w2, b2, wm, bm, ws, bs = params
    B, S = state.shape
    A = wm.shape[1]
    HP = _round_up(max(2 * A, 128), 128)      # lane-dense fused-head width

    # Pad the contraction dim of fc1 to a sublane multiple (zero columns/rows
    # contribute nothing, so the math is exact).
    S_pad = _round_up(S, 8)
    if S_pad != S:
        state = jnp.pad(state, ((0, 0), (0, S_pad - S)))
        w1 = jnp.pad(w1, ((0, S_pad - S), (0, 0)))

    # Batch tiling: large tiles for real batches, single tile for tiny ones.
    TB = min(512, _round_up(B, 8))
    B_pad = _round_up(B, TB)
    if B_pad != B:
        state = jnp.pad(state, ((0, B_pad - B), (0, 0)))

    # Fused + lane-padded head weights/bias: [wm | ws | 0...].
    w_head = jnp.pad(jnp.concatenate([wm, ws], axis=1),
                     ((0, 0), (0, HP - 2 * A)))
    b_head = jnp.pad(jnp.concatenate([bm, bs], axis=1),
                     ((0, 0), (0, HP - 2 * A)))

    # bf16 weights: native MXU dtype, half the weight DMA bytes.
    w1_b = w1.astype(jnp.bfloat16)
    w2_b = w2.astype(jnp.bfloat16)
    wh_b = w_head.astype(jnp.bfloat16)

    kern = functools.partial(policy_net_kernel, action_dim=A)
    out = pl.pallas_call(
        kern,
        out_shape=jax.ShapeDtypeStruct((B_pad, HP), jnp.float32),
        grid=(B_pad // TB,),
        in_specs=[
            pl.BlockSpec((TB, S_pad), lambda i: (i, 0)),        # activations
            pl.BlockSpec((S_pad, HIDDEN), lambda i: (0, 0)),    # fc1 W (resident)
            pl.BlockSpec((1, HIDDEN), lambda i: (0, 0)),        # fc1 b
            pl.BlockSpec((HIDDEN, HIDDEN), lambda i: (0, 0)),   # fc2 W (resident)
            pl.BlockSpec((1, HIDDEN), lambda i: (0, 0)),        # fc2 b
            pl.BlockSpec((HIDDEN, HP), lambda i: (0, 0)),       # fused head W
            pl.BlockSpec((1, HP), lambda i: (0, 0)),            # fused head b
        ],
        out_specs=pl.BlockSpec((TB, HP), lambda i: (i, 0)),
        compiler_params=pltpu.CompilerParams(
            dimension_semantics=("parallel",)),
    )(state, w1_b, b1, w2_b, b2, wh_b, b_head)

    mean = out[:B, :A]
    std = out[:B, A:2 * A]
    return mean, std


def init_params(key, state_dim, action_dim):
    """Deterministic init mirroring nn.Linear's U(-1/sqrt(in), 1/sqrt(in))."""
    def linear(k, fan_in, fan_out):
        kw, kb = jax.random.split(k)
        bound = 1.0 / jnp.sqrt(fan_in)
        w = jax.random.uniform(kw, (fan_in, fan_out), jnp.float32, -bound, bound)
        b = jax.random.uniform(kb, (1, fan_out), jnp.float32, -bound, bound)
        return w, b

    k1, k2, k3, k4 = jax.random.split(key, 4)
    w1, b1 = linear(k1, state_dim, HIDDEN)
    w2, b2 = linear(k2, HIDDEN, HIDDEN)
    wm, bm = linear(k3, HIDDEN, action_dim)
    ws, bs = linear(k4, HIDDEN, action_dim)
    return (w1, b1, w2, b2, wm, bm, ws, bs)


def reference_forward_f32(state, params):
    """Pure-f32 JAX reference of PolicyNetwork.forward."""
    w1, b1, w2, b2, wm, bm, ws, bs = params
    h1 = jax.nn.relu(state @ w1 + b1)
    h2 = jax.nn.relu(h1 @ w2 + b2)
    mean = h2 @ wm + bm
    log_std = jnp.clip(h2 @ ws + bs, -20.0, 2.0)
    return mean, jnp.exp(log_std)


def reference_forward_bf16(state, params):
    """Reference mirroring the kernel's bf16-operand / f32-accumulate matmuls."""
    w1, b1, w2, b2, wm, bm, ws, bs = params
    bf = jnp.bfloat16
    h1 = jax.nn.relu(jnp.dot(state.astype(bf), w1.astype(bf),
                             preferred_element_type=jnp.float32) + b1)
    h2 = jax.nn.relu(jnp.dot(h1.astype(bf), w2.astype(bf),
                             preferred_element_type=jnp.float32) + b2)
    mean = jnp.dot(h2.astype(bf), wm.astype(bf),
                   preferred_element_type=jnp.float32) + bm
    log_std = jnp.clip(jnp.dot(h2.astype(bf), ws.astype(bf),
                               preferred_element_type=jnp.float32) + bs,
                       -20.0, 2.0)
    return mean, jnp.exp(log_std)


if __name__ == "__main__":
    key = jax.random.PRNGKey(0)
    k_params, k_state = jax.random.split(key)

    batch, state_dim, action_dim = 8, 16, 8
    params = init_params(k_params, state_dim, action_dim)
    state = jax.random.normal(k_state, (batch, state_dim), jnp.float32)

    mean, std = jax.jit(policy_network_forward)(state, params)
    jax.block_until_ready((mean, std))

    assert mean.shape == (batch, action_dim) and std.shape == (batch, action_dim)

    # Tight check vs. a reference using the same bf16-operand matmuls.
    ref_mean_b, ref_std_b = reference_forward_bf16(state, params)
    assert jnp.allclose(mean, ref_mean_b, atol=1e-4, rtol=1e-4)
    assert jnp.allclose(std, ref_std_b, atol=1e-4, rtol=1e-4)

    # Looser check vs. the full-f32 semantics of the PyTorch module.
    ref_mean, ref_std = reference_forward_f32(state, params)
    assert jnp.allclose(mean, ref_mean, atol=5e-2, rtol=5e-2)
    assert jnp.allclose(std, ref_std, atol=5e-2, rtol=5e-2)
    assert bool(jnp.all(std > 0.0))

    # TODO(synk): PolicyNetwork.sample() uses Normal.rsample (host RNG sampling);
    # only the deterministic forward() hot path is implemented in the kernel.
    print("KERNEL_OK")
</pallas_src>

<mosaic_0001>
module attributes {stable_mosaic.version = 11 : i64} {
  func.func @policy_net_kernel(%arg0: i32, %arg1: memref<8x16xf32, #tpu.memory_space<vmem>>, %arg2: memref<16x256xbf16, #tpu.memory_space<vmem>>, %arg3: memref<1x256xf32, #tpu.memory_space<vmem>>, %arg4: memref<256x256xbf16, #tpu.memory_space<vmem>>, %arg5: memref<1x256xf32, #tpu.memory_space<vmem>>, %arg6: memref<256x128xbf16, #tpu.memory_space<vmem>>, %arg7: memref<1x128xf32, #tpu.memory_space<vmem>>, %arg8: memref<8x128xf32, #tpu.memory_space<vmem>>) attributes {dimension_semantics = [#tpu.dimension_semantics<parallel>], iteration_bounds = array<i64: 1>, scalar_prefetch = 0 : i64, scratch_operands = 0 : i64, tpu.core_type = #tpu.core_type<tc>, window_params = [{transform_indices = @transform_0, window_bounds = array<i64: 8, 16>}, {pipeline_mode = #tpu.pipeline_mode<synchronous>, transform_indices = @transform_1, window_bounds = array<i64: 16, 256>}, {pipeline_mode = #tpu.pipeline_mode<synchronous>, transform_indices = @transform_2, window_bounds = array<i64: 1, 256>}, {pipeline_mode = #tpu.pipeline_mode<synchronous>, transform_indices = @transform_3, window_bounds = array<i64: 256, 256>}, {pipeline_mode = #tpu.pipeline_mode<synchronous>, transform_indices = @transform_4, window_bounds = array<i64: 1, 256>}, {pipeline_mode = #tpu.pipeline_mode<synchronous>, transform_indices = @transform_5, window_bounds = array<i64: 256, 128>}, {pipeline_mode = #tpu.pipeline_mode<synchronous>, transform_indices = @transform_6, window_bounds = array<i64: 1, 128>}, {transform_indices = @transform_7, window_bounds = array<i64: 8, 128>}]} {
    %c0 = arith.constant 0 : index
    %c0_0 = arith.constant 0 : index
    %0 = vector.load %arg1[%c0, %c0_0] : memref<8x16xf32, #tpu.memory_space<vmem>>, vector<8x16xf32>
    %1 = arith.truncf %0 : vector<8x16xf32> to vector<8x16xbf16>
    %c0_1 = arith.constant 0 : index
    %c0_2 = arith.constant 0 : index
    %2 = vector.load %arg3[%c0_1, %c0_2] : memref<1x256xf32, #tpu.memory_space<vmem>>, vector<1x256xf32>
    %3 = vector.shape_cast %2 : vector<1x256xf32> to vector<256xf32>
    %c0_3 = arith.constant 0 : index
    %c0_4 = arith.constant 0 : index
    %4 = vector.load %arg5[%c0_3, %c0_4] : memref<1x256xf32, #tpu.memory_space<vmem>>, vector<1x256xf32>
    %5 = vector.shape_cast %4 : vector<1x256xf32> to vector<256xf32>
    %c0_5 = arith.constant 0 : index
    %c0_6 = arith.constant 0 : index
    %6 = vector.load %arg7[%c0_5, %c0_6] : memref<1x128xf32, #tpu.memory_space<vmem>>, vector<1x128xf32>
    %7 = vector.shape_cast %6 : vector<1x128xf32> to vector<128xf32>
    %c0_7 = arith.constant 0 : index
    %c0_8 = arith.constant 0 : index
    %8 = vector.load %arg2[%c0_7, %c0_8] : memref<16x256xbf16, #tpu.memory_space<vmem>>, vector<16x256xbf16>
    %cst = arith.constant dense<0.000000e+00> : vector<8x256xf32>
    %9 = tpu.matmul %1, %8, %cst {dimension_numbers = #tpu.dot_dimension_numbers<[1], [0], [0], [1], [0, 0, 1, 1], [], []>} : vector<8x16xbf16>, vector<16x256xbf16>, vector<8x256xf32> -> vector<8x256xf32>
    %10 = vector.shape_cast %3 : vector<256xf32> to vector<1x256xf32>
    %11 = vector.broadcast %10 : vector<1x256xf32> to vector<8x256xf32>
    %12 = arith.addf %9, %11 : vector<8x256xf32>
    %cst_9 = arith.constant 0.000000e+00 : f32
    %13 = vector.broadcast %cst_9 : f32 to vector<8x256xf32>
    %14 = arith.maximumf %12, %13 : vector<8x256xf32>
    %15 = arith.truncf %14 : vector<8x256xf32> to vector<8x256xbf16>
    %c0_10 = arith.constant 0 : index
    %c0_11 = arith.constant 0 : index
    %16 = vector.load %arg4[%c0_10, %c0_11] : memref<256x256xbf16, #tpu.memory_space<vmem>>, vector<256x256xbf16>
    %cst_12 = arith.constant dense<0.000000e+00> : vector<8x256xf32>
    %17 = tpu.matmul %15, %16, %cst_12 {dimension_numbers = #tpu.dot_dimension_numbers<[1], [0], [0], [1], [0, 0, 1, 1], [], []>} : vector<8x256xbf16>, vector<256x256xbf16>, vector<8x256xf32> -> vector<8x256xf32>
    %18 = vector.shape_cast %5 : vector<256xf32> to vector<1x256xf32>
    %19 = vector.broadcast %18 : vector<1x256xf32> to vector<8x256xf32>
    %20 = arith.addf %17, %19 : vector<8x256xf32>
    %cst_13 = arith.constant 0.000000e+00 : f32
    %21 = vector.broadcast %cst_13 : f32 to vector<8x256xf32>
    %22 = arith.maximumf %20, %21 : vector<8x256xf32>
    %23 = arith.truncf %22 : vector<8x256xf32> to vector<8x256xbf16>
    %c0_14 = arith.constant 0 : index
    %c0_15 = arith.constant 0 : index
    %24 = vector.load %arg6[%c0_14, %c0_15] : memref<256x128xbf16, #tpu.memory_space<vmem>>, vector<256x128xbf16>
    %cst_16 = arith.constant dense<0.000000e+00> : vector<8x128xf32>
    %25 = tpu.matmul %23, %24, %cst_16 {dimension_numbers = #tpu.dot_dimension_numbers<[1], [0], [0], [1], [0, 0, 1, 1], [], []>} : vector<8x256xbf16>, vector<256x128xbf16>, vector<8x128xf32> -> vector<8x128xf32>
    %26 = vector.shape_cast %7 : vector<128xf32> to vector<1x128xf32>
    %27 = vector.broadcast %26 : vector<1x128xf32> to vector<8x128xf32>
    %28 = arith.addf %25, %27 : vector<8x128xf32>
    %cst_17 = arith.constant -2.000000e+01 : f32
    %cst_18 = arith.constant 2.000000e+00 : f32
    %29 = vector.broadcast %cst_17 : f32 to vector<8x128xf32>
    %30 = arith.maximumf %29, %28 : vector<8x128xf32>
    %31 = vector.broadcast %cst_18 : f32 to vector<8x128xf32>
    %32 = arith.minimumf %31, %30 : vector<8x128xf32>
    %33 = math.exp %32 : vector<8x128xf32>
    %34 = tpu.iota {dimensions = array<i32: 1>} : vector<8x128xi32>
    %c8_i32 = arith.constant 8 : i32
    %35 = vector.broadcast %c8_i32 : i32 to vector<8x128xi32>
    %36 = arith.cmpi sge, %34, %35 : vector<8x128xi32>
    %c16_i32 = arith.constant 16 : i32
    %37 = vector.broadcast %c16_i32 : i32 to vector<8x128xi32>
    %38 = arith.cmpi slt, %34, %37 : vector<8x128xi32>
    %39 = arith.andi %36, %38 : vector<8x128xi1>
    %40 = arith.select %39, %33, %28 : vector<8x128xi1>, vector<8x128xf32>
    %c0_19 = arith.constant 0 : index
    %c0_20 = arith.constant 0 : index
    %41 = vector.load %arg8[%c0_19, %c0_20] : memref<8x128xf32, #tpu.memory_space<vmem>>, vector<8x128xf32>
    tpu.vector_store %arg8[%c0_19, %c0_20], %40 {strides = array<i32>} : memref<8x128xf32, #tpu.memory_space<vmem>>, vector<8x128xf32>,
    return
  }
  func.func @transform_0(%arg0: i32) -> (i32, i32) {
    %c0_i32 = arith.constant 0 : i32
    %c0_i32_0 = arith.constant 0 : i32
    return %arg0, %c0_i32 : i32, i32
  }
  func.func @transform_1(%arg0: i32) -> (i32, i32) {
    %c0_i32 = arith.constant 0 : i32
    %c0_i32_0 = arith.constant 0 : i32
    %c0_i32_1 = arith.constant 0 : i32
    return %c0_i32, %c0_i32_0 : i32, i32
  }
  func.func @transform_2(%arg0: i32) -> (i32, i32) {
    %c0_i32 = arith.constant 0 : i32
    %c0_i32_0 = arith.constant 0 : i32
    %c0_i32_1 = arith.constant 0 : i32
    return %c0_i32, %c0_i32_0 : i32, i32
  }
  func.func @transform_3(%arg0: i32) -> (i32, i32) {
    %c0_i32 = arith.constant 0 : i32
    %c0_i32_0 = arith.constant 0 : i32
    %c0_i32_1 = arith.constant 0 : i32
    return %c0_i32, %c0_i32_0 : i32, i32
  }
  func.func @transform_4(%arg0: i32) -> (i32, i32) {
    %c0_i32 = arith.constant 0 : i32
    %c0_i32_0 = arith.constant 0 : i32
    %c0_i32_1 = arith.constant 0 : i32
    return %c0_i32, %c0_i32_0 : i32, i32
  }
  func.func @transform_5(%arg0: i32) -> (i32, i32) {
    %c0_i32 = arith.constant 0 : i32
    %c0_i32_0 = arith.constant 0 : i32
    %c0_i32_1 = arith.constant 0 : i32
    return %c0_i32, %c0_i32_0 : i32, i32
  }
  func.func @transform_6(%arg0: i32) -> (i32, i32) {
    %c0_i32 = arith.constant 0 : i32
    %c0_i32_0 = arith.constant 0 : i32
    %c0_i32_1 = arith.constant 0 : i32
    return %c0_i32, %c0_i32_0 : i32, i32
  }
  func.func @transform_7(%arg0: i32) -> (i32, i32) {
    %c0_i32 = arith.constant 0 : i32
    %c0_i32_0 = arith.constant 0 : i32
    return %arg0, %c0_i32 : i32, i32
  }
}

</mosaic_0001>

<llo_original>
// kernel: policy_network_forward.1
$region0: #{policy_network_forward.1}
  #allocation0 [shape = 'u32[]', space=smem, size = 0x4, offset = 0x4, fixed_abs, tag = 'smem constant byte address 0x4 - core index']
  #allocation1 [shape = 'u32[144,128]{1,0:T(1,128)}', space=vmem, size = 0x12000, scoped, tag = 'internal scratch']
  %s0 = inlined_call_operand.vmem [shape: f32[8,16], index: 0, kind: input, shape index: {}]
  %s1 = inlined_call_operand.vmem [shape: bf16[16,256], index: 1, kind: input, shape index: {}]
  %s2 = inlined_call_operand.vmem [shape: f32[1,256], index: 2, kind: input, shape index: {}]
  %s3 = inlined_call_operand.vmem [shape: bf16[256,256], index: 3, kind: input, shape index: {}]
  %s4 = inlined_call_operand.vmem [shape: f32[1,256], index: 4, kind: input, shape index: {}]
  %s5 = inlined_call_operand.vmem [shape: bf16[256,128], index: 5, kind: input, shape index: {}]
  %s6 = inlined_call_operand.vmem [shape: f32[1,128], index: 6, kind: input, shape index: {}]
  %s7 = inlined_call_operand.vmem [shape: f32[8,128], index: 7, kind: output, shape index: {}]
  %s8 = sld [smem:[#allocation0]]
  $region38: #{policy_network_forward.1} parent=0
    _
  %s10 = ssub.s32 1, %s8
  %s11 = scalar_select 0, %s10, %s8
  // Predicated region
  $region2: #{policy_network_forward.1} parent=0 // pred_check
    _
  $region3: #{policy_network_forward.1} parent=0 // pred_check_branch
    %13 = sbr.rel (0) target = $region5
  $region4: #{policy_network_forward.1} parent=0 // pred_region
    _
  $region5: #{policy_network_forward.1} parent=0 // pred_fallthru
    _
  // Predicated region
  $region6: #{policy_network_forward.1} parent=0 // pred_check
    _
  $region7: #{policy_network_forward.1} parent=0 // pred_check_branch
    %15 = sbr.rel (0) target = $region9
  $region8: #{policy_network_forward.1} parent=0 // pred_region
    _
  $region9: #{policy_network_forward.1} parent=0 // pred_fallthru
    _
  // Predicated region
  $region10: #{policy_network_forward.1} parent=0 // pred_check
    _
  $region11: #{policy_network_forward.1} parent=0 // pred_check_branch
    %17 = sbr.rel (0) target = $region13
  $region12: #{policy_network_forward.1} parent=0 // pred_region
    _
  $region13: #{policy_network_forward.1} parent=0 // pred_fallthru
    _
  // Predicated region
  $region14: #{policy_network_forward.1} parent=0 // pred_check
    _
  $region15: #{policy_network_forward.1} parent=0 // pred_check_branch
    %19 = sbr.rel (0) target = $region17
  $region16: #{policy_network_forward.1} parent=0 // pred_region
    _
  $region17: #{policy_network_forward.1} parent=0 // pred_fallthru
    _
  // Predicated region
  $region18: #{policy_network_forward.1} parent=0 // pred_check
    _
  $region19: #{policy_network_forward.1} parent=0 // pred_check_branch
    %21 = sbr.rel (0) target = $region21
  $region20: #{policy_network_forward.1} parent=0 // pred_region
    _
  $region21: #{policy_network_forward.1} parent=0 // pred_fallthru
    _
  // Predicated region
  $region22: #{policy_network_forward.1} parent=0 // pred_check
    _
  $region23: #{policy_network_forward.1} parent=0 // pred_check_branch
    %23 = sbr.rel (0) target = $region25
  $region24: #{policy_network_forward.1} parent=0 // pred_region
    _
  $region25: #{policy_network_forward.1} parent=0 // pred_fallthru
    _
  // Predicated region
  $region26: #{policy_network_forward.1} parent=0 // pred_check
    _
  $region27: #{policy_network_forward.1} parent=0 // pred_check_branch
    %25 = sbr.rel (0) target = $region29
  $region28: #{policy_network_forward.1} parent=0 // pred_region
    _
  $region29: #{policy_network_forward.1} parent=0 // pred_fallthru
    _
  %v27 = vld [vmem:[%s0] sm:$0xff]
  %v28 = vpack.c.bf16 %v27, %v27
  %v29 = vld [vmem:[%s2] sm:$0x3]
  %v30 = vld [vmem:[%s4] sm:$0x3]
  %v31 = vld [vmem:[%s6] sm:$0x1]
  %v32 = vld [vmem:[%s1] sm:$0xff]
  %v33 = vld [vmem:[%s1 + $0x8] sm:$0xff]
  %v35 = vlaneseq
  %v36 = vshrl.u32 %v35, 7
  %v37 = vsub.s32 0, %v36
  %v38 = vrot.slane %v29, %v37
  %v39 = vlaneseq
  %v40 = vshrl.u32 %v39, 7
  %v41 = vsub.s32 1, %v40
  %v42 = vrot.slane %v29, %v41
  %v47 = vunpack.c.l.b16 %v32
  %v48 = vunpack.c.h.b16 %v32
  %v49 = vunpack.c.l.b16 %v33
  %v50 = vunpack.c.h.b16 %v33
  %v51 = vpack.c.b16 %v49, %v47
  %v52 = vpack.c.b16 %v50, %v48
  %vm55 = vcmask 130048
  %v57 = vsel %vm55, %v28, 0
  %59 = vmatprep.subr.bf16.mxu0 %v52
  %60 = vmatpush1.bf16.msra.mxu0 %v51
  %61 = vmatprep.subr.bf16.mxu0 0
  %62 = vmatpush1.bf16.msra.mxu0 0
  %63 = vmatprep.subr.bf16.mxu0 0
  %64 = vmatpush1.bf16.msra.mxu0 0
  %65 = vmatprep.subr.bf16.mxu0 0
  %66 = vmatpush1.bf16.msra.mxu0 0
  %67 = vmatprep.subr.bf16.mxu0 0
  %68 = vmatpush1.bf16.msra.mxu0 0
  %69 = vmatprep.subr.bf16.mxu0 0
  %70 = vmatpush1.bf16.msra.mxu0 0
  %71 = vmatprep.subr.bf16.mxu0 0
  %72 = vmatpush1.bf16.msra.mxu0 0
  %73 = vmatprep.subr.bf16.mxu0 0
  %74 = vmatpush1.bf16.msra.mxu0 0
  %75 = vmatprep.subr.bf16.mxu0 0
  %76 = vmatpush1.bf16.msra.mxu0 0
  %77 = vmatprep.subr.bf16.mxu0 0
  %78 = vmatpush1.bf16.msra.mxu0 0
  %79 = vmatprep.subr.bf16.mxu0 0
  %80 = vmatpush1.bf16.msra.mxu0 0
  %81 = vmatprep.subr.bf16.mxu0 0
  %82 = vmatpush1.bf16.msra.mxu0 0
  %83 = vmatprep.subr.bf16.mxu0 0
  %84 = vmatpush1.bf16.msra.mxu0 0
  %85 = vmatprep.subr.bf16.mxu0 0
  %86 = vmatpush1.bf16.msra.mxu0 0
  %87 = vmatprep.subr.bf16.mxu0 0
  %88 = vmatpush1.bf16.msra.mxu0 0
  %89 = vmatprep.subr.bf16.mxu0 0
  %90 = vmatpush1.bf16.msra.mxu0 0
  %91 = vmatprep.mubr.bf16.mxu0 0
  %92 = vmatmul.mubr.bf16.gmra.mrb[0].mxu0 %v57
  %v93 = vpop.f32.mrb[0].mxu0
  %v94 = vadd.f32 %v38, %v93
  %v95 = vpop.f32.mrb[0].mxu0
  %v96 = vadd.f32 %v42, %v95
  %v97 = vpop.f32.mrb[0].mxu0
  %v98 = vpop.f32.mrb[0].mxu0
  %99 = vdwg.mxu0
  %v100 = vmax.f32 %v94, 0.0
  %v101 = vmax.f32 %v96, 0.0
  %v102 = vpack.c.bf16 %v100, %v100
  %v103 = vpack.c.bf16 %v101, %v101
  %v104 = vld [vmem:[%s3] sm:$0xff]
  %v105 = vld [vmem:[%s3 + $0x8] sm:$0xff]
  %v106 = vld [vmem:[%s3 + $0x10] sm:$0xff]
  %v107 = vld [vmem:[%s3 + $0x18] sm:$0xff]
  %v108 = vld [vmem:[%s3 + $0x20] sm:$0xff]
  %v109 = vld [vmem:[%s3 + $0x28] sm:$0xff]
  %v110 = vld [vmem:[%s3 + $0x30] sm:$0xff]
  %v111 = vld [vmem:[%s3 + $0x38] sm:$0xff]
  %v112 = vld [vmem:[%s3 + $0x40] sm:$0xff]
  %v113 = vld [vmem:[%s3 + $0x48] sm:$0xff]
  %v114 = vld [vmem:[%s3 + $0x50] sm:$0xff]
  %v115 = vld [vmem:[%s3 + $0x58] sm:$0xff]
  %v116 = vld [vmem:[%s3 + $0x60] sm:$0xff]
  %v117 = vld [vmem:[%s3 + $0x68] sm:$0xff]
  %v118 = vld [vmem:[%s3 + $0x70] sm:$0xff]
  %v119 = vld [vmem:[%s3 + $0x78] sm:$0xff]
  %v120 = vld [vmem:[%s3 + $0x80] sm:$0xff]
  %v121 = vld [vmem:[%s3 + $0x88] sm:$0xff]
  %v122 = vld [vmem:[%s3 + $0x90] sm:$0xff]
  %v123 = vld [vmem:[%s3 + $0x98] sm:$0xff]
  %v124 = vld [vmem:[%s3 + $0xa0] sm:$0xff]
  %v125 = vld [vmem:[%s3 + $0xa8] sm:$0xff]
  %v126 = vld [vmem:[%s3 + $0xb0] sm:$0xff]
  %v127 = vld [vmem:[%s3 + $0xb8] sm:$0xff]
  %v128 = vld [vmem:[%s3 + $0xc0] sm:$0xff]
  %v129 = vld [vmem:[%s3 + $0xc8] sm:$0xff]
  %v130 = vld [vmem:[%s3 + $0xd0] sm:$0xff]
  %v131 = vld [vmem:[%s3 + $0xd8] sm:$0xff]
  %v132 = vld [vmem:[%s3 + $0xe0] sm:$0xff]
  %v133 = vld [vmem:[%s3 + $0xe8] sm:$0xff]
  %v134 = vld [vmem:[%s3 + $0xf0] sm:$0xff]
  %v135 = vld [vmem:[%s3 + $0xf8] sm:$0xff]
  %v137 = vlaneseq
  %v138 = vshrl.u32 %v137, 7
  %v139 = vsub.s32 0, %v138
  %v140 = vrot.slane %v30, %v139
  %v141 = vlaneseq
  %v142 = vshrl.u32 %v141, 7
  %v143 = vsub.s32 1, %v142
  %v144 = vrot.slane %v30, %v143
  %v179 = vunpack.c.l.b16 %v104
  %v180 = vunpack.c.h.b16 %v104
  %v181 = vunpack.c.l.b16 %v105
  %v182 = vunpack.c.h.b16 %v105
  %v183 = vunpack.c.l.b16 %v106
  %v184 = vunpack.c.h.b16 %v106
  %v185 = vunpack.c.l.b16 %v107
  %v186 = vunpack.c.h.b16 %v107
  %v187 = vunpack.c.l.b16 %v108
  %v188 = vunpack.c.h.b16 %v108
  %v189 = vunpack.c.l.b16 %v109
  %v190 = vunpack.c.h.b16 %v109
  %v191 = vunpack.c.l.b16 %v110
  %v192 = vunpack.c.h.b16 %v110
  %v193 = vunpack.c.l.b16 %v111
  %v194 = vunpack.c.h.b16 %v111
  %v195 = vunpack.c.l.b16 %v112
  %v196 = vunpack.c.h.b16 %v112
  %v197 = vunpack.c.l.b16 %v113
  %v198 = vunpack.c.h.b16 %v113
  %v199 = vunpack.c.l.b16 %v114
  %v200 = vunpack.c.h.b16 %v114
  %v201 = vunpack.c.l.b16 %v115
  %v202 = vunpack.c.h.b16 %v115
  %v203 = vunpack.c.l.b16 %v116
  %v204 = vunpack.c.h.b16 %v116
  %v205 = vunpack.c.l.b16 %v117
  %v206 = vunpack.c.h.b16 %v117
  %v207 = vunpack.c.l.b16 %v118
  %v208 = vunpack.c.h.b16 %v118
  %v209 = vunpack.c.l.b16 %v119
  %v210 = vunpack.c.h.b16 %v119
  %v211 = vunpack.c.l.b16 %v120
  %v212 = vunpack.c.h.b16 %v120
  %v213 = vunpack.c.l.b16 %v121
  %v214 = vunpack.c.h.b16 %v121
  %v215 = vunpack.c.l.b16 %v122
  %v216 = vunpack.c.h.b16 %v122
  %v217 = vunpack.c.l.b16 %v123
  %v218 = vunpack.c.h.b16 %v123
  %v219 = vunpack.c.l.b16 %v124
  %v220 = vunpack.c.h.b16 %v124
  %v221 = vunpack.c.l.b16 %v125
  %v222 = vunpack.c.h.b16 %v125
  %v223 = vunpack.c.l.b16 %v126
  %v224 = vunpack.c.h.b16 %v126
  %v225 = vunpack.c.l.b16 %v127
  %v226 = vunpack.c.h.b16 %v127
  %v227 = vunpack.c.l.b16 %v128
  %v228 = vunpack.c.h.b16 %v128
  %v229 = vunpack.c.l.b16 %v129
  %v230 = vunpack.c.h.b16 %v129
  %v231 = vunpack.c.l.b16 %v130
  %v232 = vunpack.c.h.b16 %v130
  %v233 = vunpack.c.l.b16 %v131
  %v234 = vunpack.c.h.b16 %v131
  %v235 = vunpack.c.l.b16 %v132
  %v236 = vunpack.c.h.b16 %v132
  %v237 = vunpack.c.l.b16 %v133
  %v238 = vunpack.c.h.b16 %v133
  %v239 = vunpack.c.l.b16 %v134
  %v240 = vunpack.c.h.b16 %v134
  %v241 = vunpack.c.l.b16 %v135
  %v242 = vunpack.c.h.b16 %v135
  %v243 = vpack.c.b16 %v181, %v179
  %v244 = vpack.c.b16 %v182, %v180
  %v245 = vpack.c.b16 %v185, %v183
  %v246 = vpack.c.b16 %v186, %v184
  %v247 = vpack.c.b16 %v189, %v187
  %v248 = vpack.c.b16 %v190, %v188
  %v249 = vpack.c.b16 %v193, %v191
  %v250 = vpack.c.b16 %v194, %v192
  %v251 = vpack.c.b16 %v197, %v195
  %v252 = vpack.c.b16 %v198, %v196
  %v253 = vpack.c.b16 %v201, %v199
  %v254 = vpack.c.b16 %v202, %v200
  %v255 = vpack.c.b16 %v205, %v203
  %v256 = vpack.c.b16 %v206, %v204
  %v257 = vpack.c.b16 %v209, %v207
  %v258 = vpack.c.b16 %v210, %v208
  %v259 = vpack.c.b16 %v213, %v211
  %v260 = vpack.c.b16 %v214, %v212
  %v261 = vpack.c.b16 %v217, %v215
  %v262 = vpack.c.b16 %v218, %v216
  %v263 = vpack.c.b16 %v221, %v219
  %v264 = vpack.c.b16 %v222, %v220
  %v265 = vpack.c.b16 %v225, %v223
  %v266 = vpack.c.b16 %v226, %v224
  %v267 = vpack.c.b16 %v229, %v227
  %v268 = vpack.c.b16 %v230, %v228
  %v269 = vpack.c.b16 %v233, %v231
  %v270 = vpack.c.b16 %v234, %v232
  %v271 = vpack.c.b16 %v237, %v235
  %v272 = vpack.c.b16 %v238, %v236
  %v273 = vpack.c.b16 %v241, %v239
  %v274 = vpack.c.b16 %v242, %v240
  %307 = vmatprep.subr.bf16.mxu0 %v244
  %308 = vmatpush1.bf16.msra.mxu0 %v243
  %309 = vmatprep.subr.bf16.mxu0 %v246
  %310 = vmatpush1.bf16.msra.mxu0 %v245
  %311 = vmatprep.subr.bf16.mxu0 %v248
  %312 = vmatpush1.bf16.msra.mxu0 %v247
  %313 = vmatprep.subr.bf16.mxu0 %v250
  %314 = vmatpush1.bf16.msra.mxu0 %v249
  %315 = vmatprep.subr.bf16.mxu0 %v252
  %316 = vmatpush1.bf16.msra.mxu0 %v251
  %317 = vmatprep.subr.bf16.mxu0 %v254
  %318 = vmatpush1.bf16.msra.mxu0 %v253
  %319 = vmatprep.subr.bf16.mxu0 %v256
  %320 = vmatpush1.bf16.msra.mxu0 %v255
  %321 = vmatprep.subr.bf16.mxu0 %v258
  %322 = vmatpush1.bf16.msra.mxu0 %v257
  %323 = vmatprep.subr.bf16.mxu0 %v260
  %324 = vmatpush1.bf16.msra.mxu0 %v259
  %325 = vmatprep.subr.bf16.mxu0 %v262
  %326 = vmatpush1.bf16.msra.mxu0 %v261
  %327 = vmatprep.subr.bf16.mxu0 %v264
  %328 = vmatpush1.bf16.msra.mxu0 %v263
  %329 = vmatprep.subr.bf16.mxu0 %v266
  %330 = vmatpush1.bf16.msra.mxu0 %v265
  %331 = vmatprep.subr.bf16.mxu0 %v268
  %332 = vmatpush1.bf16.msra.mxu0 %v267
  %333 = vmatprep.subr.bf16.mxu0 %v270
  %334 = vmatpush1.bf16.msra.mxu0 %v269
  %335 = vmatprep.subr.bf16.mxu0 %v272
  %336 = vmatpush1.bf16.msra.mxu0 %v271
  %337 = vmatprep.subr.bf16.mxu0 %v274
  %338 = vmatpush1.bf16.msra.mxu0 %v273
  %339 = vmatprep.mubr.bf16.mxu0 %v103
  %340 = vmatmul.mubr.bf16.gmra.mrb[0].mxu0 %v102
  %v341 = vpop.f32.mrb[0].mxu0
  %v342 = vadd.f32 %v140, %v341
  %v343 = vpop.f32.mrb[0].mxu0
  %v344 = vadd.f32 %v144, %v343
  %v345 = vpop.f32.mrb[0].mxu0
  %v346 = vpop.f32.mrb[0].mxu0
  %347 = vdwg.mxu0
  %v348 = vmax.f32 %v342, 0.0
  %v349 = vmax.f32 %v344, 0.0
  %v350 = vpack.c.bf16 %v348, %v348
  %v351 = vpack.c.bf16 %v349, %v349
  %v352 = vld [vmem:[%s5] sm:$0xf]
  %v353 = vld [vmem:[%s5 + $0x4] sm:$0xf]
  %v354 = vld [vmem:[%s5 + $0x8] sm:$0xf]
  %v355 = vld [vmem:[%s5 + $0xc] sm:$0xf]
  %v356 = vld [vmem:[%s5 + $0x10] sm:$0xf]
  %v357 = vld [vmem:[%s5 + $0x14] sm:$0xf]
  %v358 = vld [vmem:[%s5 + $0x18] sm:$0xf]
  %v359 = vld [vmem:[%s5 + $0x1c] sm:$0xf]
  %v360 = vld [vmem:[%s5 + $0x20] sm:$0xf]
  %v361 = vld [vmem:[%s5 + $0x24] sm:$0xf]
  %v362 = vld [vmem:[%s5 + $0x28] sm:$0xf]
  %v363 = vld [vmem:[%s5 + $0x2c] sm:$0xf]
  %v364 = vld [vmem:[%s5 + $0x30] sm:$0xf]
  %v365 = vld [vmem:[%s5 + $0x34] sm:$0xf]
  %v366 = vld [vmem:[%s5 + $0x38] sm:$0xf]
  %v367 = vld [vmem:[%s5 + $0x3c] sm:$0xf]
  %v368 = vld [vmem:[%s5 + $0x40] sm:$0xf]
  %v369 = vld [vmem:[%s5 + $0x44] sm:$0xf]
  %v370 = vld [vmem:[%s5 + $0x48] sm:$0xf]
  %v371 = vld [vmem:[%s5 + $0x4c] sm:$0xf]
  %v372 = vld [vmem:[%s5 + $0x50] sm:$0xf]
  %v373 = vld [vmem:[%s5 + $0x54] sm:$0xf]
  %v374 = vld [vmem:[%s5 + $0x58] sm:$0xf]
  %v375 = vld [vmem:[%s5 + $0x5c] sm:$0xf]
  %v376 = vld [vmem:[%s5 + $0x60] sm:$0xf]
  %v377 = vld [vmem:[%s5 + $0x64] sm:$0xf]
  %v378 = vld [vmem:[%s5 + $0x68] sm:$0xf]
  %v379 = vld [vmem:[%s5 + $0x6c] sm:$0xf]
  %v380 = vld [vmem:[%s5 + $0x70] sm:$0xf]
  %v381 = vld [vmem:[%s5 + $0x74] sm:$0xf]
  %v382 = vld [vmem:[%s5 + $0x78] sm:$0xf]
  %v383 = vld [vmem:[%s5 + $0x7c] sm:$0xf]
  %v385 = vlaneseq
  %v386 = vshrl.u32 %v385, 7
  %v387 = vsub.s32 0, %v386
  %v388 = vrot.slane %v31, %v387
  %v422 = vunpack.c.l.b16 %v352
  %v423 = vunpack.c.l.b16 %v353
  %v424 = vunpack.c.l.b16 %v354
  %v425 = vunpack.c.l.b16 %v355
  %v426 = vunpack.c.l.b16 %v356
  %v427 = vunpack.c.l.b16 %v357
  %v428 = vunpack.c.l.b16 %v358
  %v429 = vunpack.c.l.b16 %v359
  %v430 = vunpack.c.l.b16 %v360
  %v431 = vunpack.c.l.b16 %v361
  %v432 = vunpack.c.l.b16 %v362
  %v433 = vunpack.c.l.b16 %v363
  %v434 = vunpack.c.l.b16 %v364
  %v435 = vunpack.c.l.b16 %v365
  %v436 = vunpack.c.l.b16 %v366
  %v437 = vunpack.c.l.b16 %v367
  %v438 = vunpack.c.l.b16 %v368
  %v439 = vunpack.c.l.b16 %v369
  %v440 = vunpack.c.l.b16 %v370
  %v441 = vunpack.c.l.b16 %v371
  %v442 = vunpack.c.l.b16 %v372
  %v443 = vunpack.c.l.b16 %v373
  %v444 = vunpack.c.l.b16 %v374
  %v445 = vunpack.c.l.b16 %v375
  %v446 = vunpack.c.l.b16 %v376
  %v447 = vunpack.c.l.b16 %v377
  %v448 = vunpack.c.l.b16 %v378
  %v449 = vunpack.c.l.b16 %v379
  %v450 = vunpack.c.l.b16 %v380
  %v451 = vunpack.c.l.b16 %v381
  %v452 = vunpack.c.l.b16 %v382
  %v453 = vunpack.c.l.b16 %v383
  %v454 = vpack.c.b16 %v423, %v422
  %v455 = vpack.c.b16 %v425, %v424
  %v456 = vpack.c.b16 %v427, %v426
  %v457 = vpack.c.b16 %v429, %v428
  %v458 = vpack.c.b16 %v431, %v430
  %v459 = vpack.c.b16 %v433, %v432
  %v460 = vpack.c.b16 %v435, %v434
  %v461 = vpack.c.b16 %v437, %v436
  %v462 = vpack.c.b16 %v439, %v438
  %v463 = vpack.c.b16 %v441, %v440
  %v464 = vpack.c.b16 %v443, %v442
  %v465 = vpack.c.b16 %v445, %v444
  %v466 = vpack.c.b16 %v447, %v446
  %v467 = vpack.c.b16 %v449, %v448
  %v468 = vpack.c.b16 %v451, %v450
  %v469 = vpack.c.b16 %v453, %v452
  %486 = vmatprep.subr.bf16.mxu0 0
  %487 = vmatpush1.bf16.msra.mxu0 %v454
  %488 = vmatprep.subr.bf16.mxu0 0
  %489 = vmatpush1.bf16.msra.mxu0 %v455
  %490 = vmatprep.subr.bf16.mxu0 0
  %491 = vmatpush1.bf16.msra.mxu0 %v456
  %492 = vmatprep.subr.bf16.mxu0 0
  %493 = vmatpush1.bf16.msra.mxu0 %v457
  %494 = vmatprep.subr.bf16.mxu0 0
  %495 = vmatpush1.bf16.msra.mxu0 %v458
  %496 = vmatprep.subr.bf16.mxu0 0
  %497 = vmatpush1.bf16.msra.mxu0 %v459
  %498 = vmatprep.subr.bf16.mxu0 0
  %499 = vmatpush1.bf16.msra.mxu0 %v460
  %500 = vmatprep.subr.bf16.mxu0 0
  %501 = vmatpush1.bf16.msra.mxu0 %v461
  %502 = vmatprep.subr.bf16.mxu0 0
  %503 = vmatpush1.bf16.msra.mxu0 %v462
  %504 = vmatprep.subr.bf16.mxu0 0
  %505 = vmatpush1.bf16.msra.mxu0 %v463
  %506 = vmatprep.subr.bf16.mxu0 0
  %507 = vmatpush1.bf16.msra.mxu0 %v464
  %508 = vmatprep.subr.bf16.mxu0 0
  %509 = vmatpush1.bf16.msra.mxu0 %v465
  %510 = vmatprep.subr.bf16.mxu0 0
  %511 = vmatpush1.bf16.msra.mxu0 %v466
  %512 = vmatprep.subr.bf16.mxu0 0
  %513 = vmatpush1.bf16.msra.mxu0 %v467
  %514 = vmatprep.subr.bf16.mxu0 0
  %515 = vmatpush1.bf16.msra.mxu0 %v468
  %516 = vmatprep.subr.bf16.mxu0 0
  %517 = vmatpush1.bf16.msra.mxu0 %v469
  %518 = vmatprep.mubr.bf16.mxu0 %v351
  %519 = vmatmul.mubr.bf16.gmra.mrb[0].mxu0 %v350
  %v520 = vpop.f32.mrb[0].mxu0
  %v521 = vadd.f32 %v388, %v520
  %v522 = vpop.f32.mrb[0].mxu0
  %v523 = vpop.f32.mrb[0].mxu0
  %v524 = vpop.f32.mrb[0].mxu0
  %525 = vdwg.mxu0
  %v526 = vmax.f32 %v521, -20.0
  %v527 = vmin.f32 %v526, 2.0
  %v528 = vmul.f32 %v527, 1.442695
  %v529 = vpow.pop %v528
  %v530 = vlaneseq
  %v531 = vand.u32 %v530, 127
  %vm532 = vcmp.ge.s32.totalorder %v531, 8
  %vm533 = vcmp.lt.s32.totalorder %v531, 16
  %vm534 = vmand %vm532, %vm533
  %v535 = vsel %vm534, %v529, %v521
  %536 = vst [vmem:[%s7] sm:$0xff] %v535
  // Predicated region
  $region30: #{policy_network_forward.1} parent=0 // pred_check
    _
  $region31: #{policy_network_forward.1} parent=0 // pred_check_branch
    %538 = sbr.rel (0) target = $region33
  $region32: #{policy_network_forward.1} parent=0 // pred_region
    _
  $region33: #{policy_network_forward.1} parent=0 // pred_fallthru
    _
  // Predicated region
  $region34: #{policy_network_forward.1} parent=0 // pred_check
    _
  $region35: #{policy_network_forward.1} parent=0 // pred_check_branch
    %540 = sbr.rel (0) target = $region37
  $region36: #{policy_network_forward.1} parent=0 // pred_region
    _
  $region37: #{policy_network_forward.1} parent=0 // pred_fallthru
    _

</llo_original>
